<compile_context>
chip_gen: v7x
topology: tpu7x:2x2x1
jax: 0.10.0
libtpu: 0.0.40
codegen_flags: <defaults>
</compile_context>

<pallas_src>
import functools

import jax
import jax.numpy as jnp
from jax.experimental import pallas as pl
from jax.experimental.pallas import tpu as pltpu

_LANES = 128


def _rational_kernel(a_ref, b_ref, x_ref, o_ref, *, n_num, n_den):
    """Element-wise Rational (Pade) activation, version 'A'.

    a_ref: (n_num,) f32 in SMEM  -- numerator coeffs a_0..a_m
    b_ref: (n_den,) f32 in SMEM  -- denominator coeffs b_1..b_n (leading 1 implicit)
    x_ref/o_ref: (block_rows, 128) VMEM tiles.
    """
    x = x_ref[...].astype(jnp.float32)

    # Numerator P(x) via Horner; SMEM scalar reads broadcast over the tile.
    p = a_ref[n_num - 1]
    for i in range(n_num - 2, -1, -1):
        p = p * x + a_ref[i]

    # Denominator inner poly: b_1*x + ... + b_n*x^n = x * (b_1 + b_2*x + ...)
    q = b_ref[n_den - 1]
    for i in range(n_den - 2, -1, -1):
        q = q * x + b_ref[i]
    q = q * x

    den = 1.0 + jnp.abs(q)          # version 'A': Q >= 1, never zero
    o_ref[...] = (p / den).astype(o_ref.dtype)


def static_rational_forward(x, numerator_weights, denominator_weights,
                            control_params=None, *, block_rows=8192):
    """Pallas forward for StaticRationalNonlinearity.

    x:                   (batch, 1, seq)
    numerator_weights:   (degrees[0] + 1,)  -- a_0 .. a_m
    denominator_weights: (degrees[1],)      -- b_1 .. b_n
    Returns (y, {}) matching the torch module.
    """
    assert control_params is None            # module asserts this too
    bs, chs, seq_len = x.shape
    assert chs == 1

    a = jnp.asarray(numerator_weights, dtype=jnp.float32)
    b = jnp.asarray(denominator_weights, dtype=jnp.float32)
    n_num = int(a.shape[0])
    n_den = int(b.shape[0])

    # ---- lane-dense (rows, 128) view of the flattened signal, padded ----
    n_total = bs * seq_len
    n_rows = pl.cdiv(n_total, _LANES)
    blk = int(min(int(block_rows), ((n_rows + 7) // 8) * 8))
    blk = max(8, (blk // 8) * 8)
    n_blocks = pl.cdiv(n_rows, blk)
    # Rebalance block size so tail padding stays within a few rows per block.
    blk = ((pl.cdiv(n_rows, n_blocks) + 7) // 8) * 8
    padded_rows = n_blocks * blk
    padded_total = padded_rows * _LANES

    x_flat = x.reshape(-1)
    if padded_total != n_total:
        x_flat = jnp.pad(x_flat, (0, padded_total - n_total))
    x2 = x_flat.reshape(padded_rows, _LANES)

    kernel = functools.partial(_rational_kernel, n_num=n_num, n_den=n_den)

    itemsize = jnp.dtype(x.dtype).itemsize
    cost = pl.CostEstimate(
        flops=padded_total * (2 * n_num + 2 * n_den + 3),
        transcendentals=padded_total,                      # the divide / rcp
        bytes_accessed=2 * padded_total * itemsize + (n_num + n_den) * 4,
    )

    out2 = pl.pallas_call(
        kernel,
        out_shape=jax.ShapeDtypeStruct((padded_rows, _LANES), x.dtype),
        grid_spec=pltpu.PrefetchScalarGridSpec(
            num_scalar_prefetch=0,
            grid=(n_blocks,),
            in_specs=[
                pl.BlockSpec(memory_space=pltpu.MemorySpace.SMEM),   # a coeffs
                pl.BlockSpec(memory_space=pltpu.MemorySpace.SMEM),   # b coeffs
                pl.BlockSpec((blk, _LANES), lambda i: (i, 0)),
            ],
            out_specs=pl.BlockSpec((blk, _LANES), lambda i: (i, 0)),
        ),
        compiler_params=pltpu.CompilerParams(
            dimension_semantics=("parallel",),
        ),
        cost_estimate=cost,
    )(a, b, x2)

    y = out2.reshape(-1)[:n_total].reshape(bs, chs, seq_len)
    return y, {}   # get_param_dict() of this module is always {}


if __name__ == "__main__":
    key0, key1 = jax.random.split(jax.random.PRNGKey(0))
    DEGREES = (6, 5)

    # Degree-(6,5) version-'A' coefficients initialised from the [5/4] Pade
    # approximant of tanh (module's init_approx_func='tanh'), zero-padded to
    # the requested degrees:  P(x)=x + x^3/9 + x^5/945,  Q(x)=1 + 4x^2/9 + x^4/63.
    # TODO(synk): the `rational_activations` package loads least-squares-fitted
    # tanh coefficients from its bundled JSON; those exact constants are not
    # embedded here (coefficients are runtime inputs to the kernel anyway).
    a = jnp.array([0.0, 1.0, 0.0, 1.0 / 9.0, 0.0, 1.0 / 945.0, 0.0], jnp.float32)
    b = jnp.array([0.0, 4.0 / 9.0, 0.0, 1.0 / 63.0, 0.0], jnp.float32)
    assert a.shape[0] == DEGREES[0] + 1 and b.shape[0] == DEGREES[1]

    def reference(x):
        xf = x.astype(jnp.float32)
        powers = jnp.stack([xf ** k for k in range(DEGREES[0] + 1)], axis=-1)
        num = jnp.sum(powers * a, axis=-1)
        den = 1.0 + jnp.abs(jnp.sum(powers[..., 1:DEGREES[1] + 1] * b, axis=-1))
        return num / den

    # ---- test 1: small shape, T not a multiple of 128 (exercises padding) ----
    B, C, T = 2, 1, 1000
    x = 2.0 * jax.random.normal(key0, (B, C, T), dtype=jnp.float32)
    y, param_dict = static_rational_forward(x, a, b, control_params=None)
    y = jax.block_until_ready(y)

    assert y.shape == (B, C, T)
    assert param_dict == {}
    assert jnp.allclose(y, reference(x), rtol=1e-4, atol=1e-5)
    # Sanity: with the tanh-Pade init the nonlinearity tracks tanh for |x| < 2.
    small = jnp.abs(x) < 2.0
    assert jnp.max(jnp.where(small, jnp.abs(y - jnp.tanh(x)), 0.0)) < 5e-3

    # ---- test 2: force the multi-block grid path (small explicit block) ----
    x2 = 1.5 * jax.random.normal(key1, (2, 1, 80_000), dtype=jnp.float32)
    y2, _ = static_rational_forward(x2, a, b, control_params=None, block_rows=256)
    y2 = jax.block_until_ready(y2)
    assert y2.shape == x2.shape
    assert jnp.allclose(y2, reference(x2), rtol=1e-4, atol=1e-5)

    print("KERNEL_OK")
</pallas_src>

<mosaic_0001>
module attributes {stable_mosaic.version = 11 : i64} {
  func.func @_rational_kernel(%arg0: i32, %arg1: memref<7xf32, #tpu.memory_space<smem>>, %arg2: memref<5xf32, #tpu.memory_space<smem>>, %arg3: memref<16x128xf32, #tpu.memory_space<vmem>>, %arg4: memref<16x128xf32, #tpu.memory_space<vmem>>) attributes {dimension_semantics = [#tpu.dimension_semantics<parallel>], iteration_bounds = array<i64: 1>, scalar_prefetch = 0 : i64, scratch_operands = 0 : i64, tpu.core_type = #tpu.core_type<tc>, window_params = [{transform_indices = @transform_0, window_bounds = array<i64: 7>}, {transform_indices = @transform_1, window_bounds = array<i64: 5>}, {transform_indices = @transform_2, window_bounds = array<i64: 16, 128>}, {transform_indices = @transform_3, window_bounds = array<i64: 16, 128>}]} {
    %c0 = arith.constant 0 : index
    %c0_0 = arith.constant 0 : index
    %0 = vector.load %arg3[%c0, %c0_0] : memref<16x128xf32, #tpu.memory_space<vmem>>, vector<16x128xf32>
    %c6 = arith.constant 6 : index
    %1 = memref.load %arg1[%c6] : memref<7xf32, #tpu.memory_space<smem>>
    %2 = vector.broadcast %1 : f32 to vector<16x128xf32>
    %3 = arith.mulf %2, %0 : vector<16x128xf32>
    %c5 = arith.constant 5 : index
    %4 = memref.load %arg1[%c5] : memref<7xf32, #tpu.memory_space<smem>>
    %5 = vector.broadcast %4 : f32 to vector<16x128xf32>
    %6 = arith.addf %3, %5 : vector<16x128xf32>
    %7 = arith.mulf %6, %0 : vector<16x128xf32>
    %c4 = arith.constant 4 : index
    %8 = memref.load %arg1[%c4] : memref<7xf32, #tpu.memory_space<smem>>
    %9 = vector.broadcast %8 : f32 to vector<16x128xf32>
    %10 = arith.addf %7, %9 : vector<16x128xf32>
    %11 = arith.mulf %10, %0 : vector<16x128xf32>
    %c3 = arith.constant 3 : index
    %12 = memref.load %arg1[%c3] : memref<7xf32, #tpu.memory_space<smem>>
    %13 = vector.broadcast %12 : f32 to vector<16x128xf32>
    %14 = arith.addf %11, %13 : vector<16x128xf32>
    %15 = arith.mulf %14, %0 : vector<16x128xf32>
    %c2 = arith.constant 2 : index
    %16 = memref.load %arg1[%c2] : memref<7xf32, #tpu.memory_space<smem>>
    %17 = vector.broadcast %16 : f32 to vector<16x128xf32>
    %18 = arith.addf %15, %17 : vector<16x128xf32>
    %19 = arith.mulf %18, %0 : vector<16x128xf32>
    %c1 = arith.constant 1 : index
    %20 = memref.load %arg1[%c1] : memref<7xf32, #tpu.memory_space<smem>>
    %21 = vector.broadcast %20 : f32 to vector<16x128xf32>
    %22 = arith.addf %19, %21 : vector<16x128xf32>
    %23 = arith.mulf %22, %0 : vector<16x128xf32>
    %c0_1 = arith.constant 0 : index
    %24 = memref.load %arg1[%c0_1] : memref<7xf32, #tpu.memory_space<smem>>
    %25 = vector.broadcast %24 : f32 to vector<16x128xf32>
    %26 = arith.addf %23, %25 : vector<16x128xf32>
    %c4_2 = arith.constant 4 : index
    %27 = memref.load %arg2[%c4_2] : memref<5xf32, #tpu.memory_space<smem>>
    %28 = vector.broadcast %27 : f32 to vector<16x128xf32>
    %29 = arith.mulf %28, %0 : vector<16x128xf32>
    %c3_3 = arith.constant 3 : index
    %30 = memref.load %arg2[%c3_3] : memref<5xf32, #tpu.memory_space<smem>>
    %31 = vector.broadcast %30 : f32 to vector<16x128xf32>
    %32 = arith.addf %29, %31 : vector<16x128xf32>
    %33 = arith.mulf %32, %0 : vector<16x128xf32>
    %c2_4 = arith.constant 2 : index
    %34 = memref.load %arg2[%c2_4] : memref<5xf32, #tpu.memory_space<smem>>
    %35 = vector.broadcast %34 : f32 to vector<16x128xf32>
    %36 = arith.addf %33, %35 : vector<16x128xf32>
    %37 = arith.mulf %36, %0 : vector<16x128xf32>
    %c1_5 = arith.constant 1 : index
    %38 = memref.load %arg2[%c1_5] : memref<5xf32, #tpu.memory_space<smem>>
    %39 = vector.broadcast %38 : f32 to vector<16x128xf32>
    %40 = arith.addf %37, %39 : vector<16x128xf32>
    %41 = arith.mulf %40, %0 : vector<16x128xf32>
    %c0_6 = arith.constant 0 : index
    %42 = memref.load %arg2[%c0_6] : memref<5xf32, #tpu.memory_space<smem>>
    %43 = vector.broadcast %42 : f32 to vector<16x128xf32>
    %44 = arith.addf %41, %43 : vector<16x128xf32>
    %45 = arith.mulf %44, %0 : vector<16x128xf32>
    %46 = math.absf %45 : vector<16x128xf32>
    %cst = arith.constant 1.000000e+00 : f32
    %47 = vector.broadcast %cst : f32 to vector<16x128xf32>
    %48 = arith.addf %47, %46 : vector<16x128xf32>
    %49 = arith.divf %26, %48 : vector<16x128xf32>
    %c0_7 = arith.constant 0 : index
    %c0_8 = arith.constant 0 : index
    %50 = vector.load %arg4[%c0_7, %c0_8] : memref<16x128xf32, #tpu.memory_space<vmem>>, vector<16x128xf32>
    tpu.vector_store %arg4[%c0_7, %c0_8], %49 {strides = array<i32>} : memref<16x128xf32, #tpu.memory_space<vmem>>, vector<16x128xf32>,
    return
  }
  func.func @transform_0(%arg0: i32) -> i32 {
    %c0_i32 = arith.constant 0 : i32
    %c0_i32_0 = arith.constant 0 : i32
    return %c0_i32 : i32
  }
  func.func @transform_1(%arg0: i32) -> i32 {
    %c0_i32 = arith.constant 0 : i32
    %c0_i32_0 = arith.constant 0 : i32
    return %c0_i32 : i32
  }
  func.func @transform_2(%arg0: i32) -> (i32, i32) {
    %c0_i32 = arith.constant 0 : i32
    %c0_i32_0 = arith.constant 0 : i32
    return %arg0, %c0_i32 : i32, i32
  }
  func.func @transform_3(%arg0: i32) -> (i32, i32) {
    %c0_i32 = arith.constant 0 : i32
    %c0_i32_0 = arith.constant 0 : i32
    return %arg0, %c0_i32 : i32, i32
  }
}

</mosaic_0001>

<llo_original>
// kernel: tpu_custom_call.1
$region0: #{tpu_custom_call.1}
  #allocation0 [shape = 'u32[]', space=smem, size = 0x4, offset = 0x4, fixed_abs, tag = 'smem constant byte address 0x4 - core index']
  #allocation1 [shape = 'u32[144,128]{1,0:T(1,128)}', space=vmem, size = 0x12000, scoped, tag = 'internal scratch']
  %s0 = inlined_call_operand.hbm [shape: f32[7], index: 0, kind: input, shape index: {}]
  %s1 = inlined_call_operand.vmem [shape: f32[5], index: 1, kind: input, shape index: {}]
  %s2 = inlined_call_operand.hbm [shape: f32[16,128], index: 2, kind: input, shape index: {}]
  %s3 = inlined_call_operand.hbm [shape: f32[16,128], index: 3, kind: output, shape index: {}]
  %s4 = sld [smem:[#allocation0]]
  $region34: #{tpu_custom_call.1} parent=0
    _
  %s6 = ssub.s32 1, %s4
  %s7 = scalar_select 0, %s6, %s4
  $region1: #{tpu_custom_call.1} parent=0
    #allocation2 [shape = 'u8[512]{0}', space=smem, size = 0x200, scoped, tag = 'input window, operand 0, single buffered']
    #allocation3 [shape = 's32[1]{0}', space=sflag, size = 0x4, scoped, tag = 'scoped memory for tpu_custom_call.1']
    #allocation4 [shape = 's32[1]{0}', space=sflag, size = 0x4, scoped, tag = 'scoped memory for tpu_custom_call.1']
    #allocation5 [shape = 's32[1]{0}', space=sflag, size = 0x4, scoped, tag = 'scoped memory for tpu_custom_call.1']
    #allocation6 [shape = 's32[1]{0}', space=sflag, size = 0x4, scoped, tag = 'scoped memory for tpu_custom_call.1']
    #allocation7 [shape = 'u8[512]{0}', space=smem, size = 0x200, scoped, tag = 'input window, operand 1, single buffered']
    #allocation8 [shape = 'u8[8192]{0}', space=vmem, size = 0x2000, scoped, tag = 'input window, operand 2, single buffered']
    #allocation9 [shape = 'u8[8192]{0}', space=vmem, size = 0x2000, scoped, tag = 'output window, operand 0, single buffered']
    %8 = vsyncpa [#allocation5], 0
    %9 = vsyncpa [#allocation6], 0
    %10 = vsyncpa [#allocation3], 0
    %11 = vsyncpa [#allocation4], 0
    // Predicated region
    $region2: #{tpu_custom_call.1} parent=1 // pred_check
      _
    $region3: #{tpu_custom_call.1} parent=1 // pred_check_branch
      %13 = sbr.rel (0) target = $region5
    $region4: #{tpu_custom_call.1} parent=1 // pred_region
      %s15 = ssub.s32 16, 16
      %16 = vsyncadd [#allocation5], %s15
      %19 = dma.hbm_to_smem %s0, 16, [#allocation2], [#allocation5]
    $region5: #{tpu_custom_call.1} parent=1 // pred_fallthru
      _
    // Predicated region
    $region6: #{tpu_custom_call.1} parent=1 // pred_check
      _
    $region7: #{tpu_custom_call.1} parent=1 // pred_check_branch
      %21 = sbr.rel (0) target = $region9
    $region8: #{tpu_custom_call.1} parent=1 // pred_region
      %s23 = ssub.s32 16, 16
      %24 = vsyncadd [#allocation6], %s23
      %s26 = sshll.u32 %s1, 4
      %s27 = int_to_ptr.vmem [resolvable:$true] %s26
      %29 = dma.vmem_to_smem %s27, 16, [#allocation7], [#allocation6]
    $region9: #{tpu_custom_call.1} parent=1 // pred_fallthru
      _
    // Predicated region
    $region10: #{tpu_custom_call.1} parent=1 // pred_check
      _
    $region11: #{tpu_custom_call.1} parent=1 // pred_check_branch
      %31 = sbr.rel (0) target = $region13
    $region12: #{tpu_custom_call.1} parent=1 // pred_region
      %s33 = ssub.s32 256, 256
      %34 = vsyncadd [#allocation3], %s33
      %s35 = sshll.u32 [#allocation8], 4
      %s36 = int_to_ptr.vmem [resolvable:$true] %s35
      %41 = dma.hbm_to_vmem [thread:$0]  %s2, 256, %s36, [#allocation3], 128, 128, 8
    $region13: #{tpu_custom_call.1} parent=1 // pred_fallthru
      _
    // Predicated region
    $region14: #{tpu_custom_call.1} parent=1 // pred_check
      _
    $region15: #{tpu_custom_call.1} parent=1 // pred_check_branch
      %43 = sbr.rel (0) target = $region17
    $region16: #{tpu_custom_call.1} parent=1 // pred_region
      %44 = dma.done [#allocation5], 16
    $region17: #{tpu_custom_call.1} parent=1 // pred_fallthru
      _
    // Predicated region
    $region18: #{tpu_custom_call.1} parent=1 // pred_check
      _
    $region19: #{tpu_custom_call.1} parent=1 // pred_check_branch
      %46 = sbr.rel (0) target = $region21
    $region20: #{tpu_custom_call.1} parent=1 // pred_region
      %47 = dma.done [#allocation6], 16
    $region21: #{tpu_custom_call.1} parent=1 // pred_fallthru
      _
    // Predicated region
    $region22: #{tpu_custom_call.1} parent=1 // pred_check
      _
    $region23: #{tpu_custom_call.1} parent=1 // pred_check_branch
      %49 = sbr.rel (0) target = $region25
    $region24: #{tpu_custom_call.1} parent=1 // pred_region
      %50 = dma.done [#allocation3], 256
    $region25: #{tpu_custom_call.1} parent=1 // pred_fallthru
      _
    %51 = sfence
    %v52 = vld [vmem:[#allocation8] sm:$0xff]
    %v53 = vld [vmem:[#allocation8 + $0x8] sm:$0xff]
    %s54 = sld [smem:[#allocation2 + $0x6]]
    %v55 = vstv %s54
    %v56 = vmul.f32 %v55, %v52
    %v57 = vmul.f32 %v55, %v53
    %s58 = sld [smem:[#allocation2 + $0x5]]
    %v59 = vstv %s58
    %v60 = vadd.f32 %v56, %v59
    %v61 = vadd.f32 %v57, %v59
    %v62 = vmul.f32 %v60, %v52
    %v63 = vmul.f32 %v61, %v53
    %s64 = sld [smem:[#allocation2 + $0x4]]
    %v65 = vstv %s64
    %v66 = vadd.f32 %v62, %v65
    %v67 = vadd.f32 %v63, %v65
    %v68 = vmul.f32 %v66, %v52
    %v69 = vmul.f32 %v67, %v53
    %s70 = sld [smem:[#allocation2 + $0x3]]
    %v71 = vstv %s70
    %v72 = vadd.f32 %v68, %v71
    %v73 = vadd.f32 %v69, %v71
    %v74 = vmul.f32 %v72, %v52
    %v75 = vmul.f32 %v73, %v53
    %s76 = sld [smem:[#allocation2 + $0x2]]
    %v77 = vstv %s76
    %v78 = vadd.f32 %v74, %v77
    %v79 = vadd.f32 %v75, %v77
    %v80 = vmul.f32 %v78, %v52
    %v81 = vmul.f32 %v79, %v53
    %s82 = sld [smem:[#allocation2 + $0x1]]
    %v83 = vstv %s82
    %v84 = vadd.f32 %v80, %v83
    %v85 = vadd.f32 %v81, %v83
    %v86 = vmul.f32 %v84, %v52
    %v87 = vmul.f32 %v85, %v53
    %s88 = sld [smem:[#allocation2]]
    %v89 = vstv %s88
    %v90 = vadd.f32 %v86, %v89
    %v91 = vadd.f32 %v87, %v89
    %s92 = sld [smem:[#allocation7 + $0x4]]
    %v93 = vstv %s92
    %v94 = vmul.f32 %v93, %v52
    %v95 = vmul.f32 %v93, %v53
    %s96 = sld [smem:[#allocation7 + $0x3]]
    %v97 = vstv %s96
    %v98 = vadd.f32 %v94, %v97
    %v99 = vadd.f32 %v95, %v97
    %v100 = vmul.f32 %v98, %v52
    %v101 = vmul.f32 %v99, %v53
    %s102 = sld [smem:[#allocation7 + $0x2]]
    %v103 = vstv %s102
    %v104 = vadd.f32 %v100, %v103
    %v105 = vadd.f32 %v101, %v103
    %v106 = vmul.f32 %v104, %v52
    %v107 = vmul.f32 %v105, %v53
    %s108 = sld [smem:[#allocation7 + $0x1]]
    %v109 = vstv %s108
    %v110 = vadd.f32 %v106, %v109
    %v111 = vadd.f32 %v107, %v109
    %v112 = vmul.f32 %v110, %v52
    %v113 = vmul.f32 %v111, %v53
    %s114 = sld [smem:[#allocation7]]
    %v115 = vstv %s114
    %v116 = vadd.f32 %v112, %v115
    %v117 = vadd.f32 %v113, %v115
    %v118 = vmul.f32 %v116, %v52
    %v119 = vmul.f32 %v117, %v53
    %v120 = vand.u32 2147483647, %v118
    %v121 = vand.u32 2147483647, %v119
    %v122 = vadd.f32 %v120, 1.0
    %v123 = vadd.f32 %v121, 1.0
    %v124 = vrcp.pop %v122
    %v125 = vmul.f32 %v90, %v124
    %v126 = vrcp.pop %v123
    %v127 = vmul.f32 %v91, %v126
    %128 = vst [vmem:[#allocation9] sm:$0xff] %v125
    %129 = vst [vmem:[#allocation9 + $0x8] sm:$0xff] %v127
    // Predicated region
    $region26: #{tpu_custom_call.1} parent=1 // pred_check
      _
    $region27: #{tpu_custom_call.1} parent=1 // pred_check_branch
      %131 = sbr.rel (0) target = $region29
    $region28: #{tpu_custom_call.1} parent=1 // pred_region
      %s133 = ssub.s32 256, 256
      %134 = vsyncadd [#allocation4], %s133
      %s135 = sshll.u32 [#allocation9], 4
      %s136 = int_to_ptr.vmem [resolvable:$true] %s135
      %141 = dma.vmem_to_hbm [thread:$0]  %s136, 256, %s3, [#allocation4], 128, 128, 8
    $region29: #{tpu_custom_call.1} parent=1 // pred_fallthru
      _
    // Predicated region
    $region30: #{tpu_custom_call.1} parent=1 // pred_check
      _
    $region31: #{tpu_custom_call.1} parent=1 // pred_check_branch
      %143 = sbr.rel (0) target = $region33
    $region32: #{tpu_custom_call.1} parent=1 // pred_region
      %144 = dma.done [#allocation4], 256
    $region33: #{tpu_custom_call.1} parent=1 // pred_fallthru
      _
    %145 = vsyncpa [#allocation3], 1
    %146 = vsyncpa [#allocation4], 1
    %147 = vsyncpa [#allocation5], 1
    %148 = vsyncpa [#allocation6], 1

</llo_original>
